<compile_context>
chip_gen: v7x
topology: tpu7x:2x2x1
jax: 0.10.0
libtpu: 0.0.40
codegen_flags: <defaults>
</compile_context>

<pallas_src>
import math
from typing import List, Optional

import jax
import jax.numpy as jnp
from jax import lax
from jax.experimental import pallas as pl
from jax.experimental.pallas import tpu as pltpu


# ------------------------------ Pallas kernel --------------------------------
def _make_gather_kernel(tile_rows: int):
    """Builds a kernel gathering `tile_rows` embedding rows per grid step."""

    def kernel(idx_ref, emb_hbm, out_ref, sem):
        # idx_ref : (n_idx_padded,) int32 in SMEM (scalar prefetch)
        # emb_hbm : (n_nodes, emb_size) table, left in HBM (pl.ANY)
        # out_ref : (tile_rows, emb_size) VMEM output block (sublane-dense)
        # sem     : one shared DMA semaphore (all row copies are equal-sized)
        base = pl.program_id(0) * tile_rows
        unroll = tile_rows <= 64

        def start_row(r, carry):
            row = idx_ref[base + r]
            pltpu.make_async_copy(emb_hbm.at[row], out_ref.at[r], sem).start()
            return carry

        lax.fori_loop(0, tile_rows, start_row, 0, unroll=unroll)

        def wait_row(r, carry):
            # Descriptor has the same size as every started copy, so each wait
            # retires exactly one in-flight row DMA.
            pltpu.make_async_copy(emb_hbm.at[0], out_ref.at[0], sem).wait()
            return carry

        lax.fori_loop(0, tile_rows, wait_row, 0, unroll=unroll)

    return kernel


def _sublane_multiple(dtype) -> int:
    # f32 -> 8, bf16 -> 16, int8/fp8 -> 32 (sublane packing).
    itemsize = jnp.dtype(dtype).itemsize
    return max(8, 32 // max(itemsize, 1))


def gather_embeddings(emb: jax.Array, node_index: jax.Array,
                      tile_rows: Optional[int] = None) -> jax.Array:
    """Pallas DMA-gather of rows of `emb` (n_nodes, emb_size) by `node_index`."""
    n_nodes, emb_size = emb.shape
    n_idx = int(node_index.shape[0])
    itemsize = jnp.dtype(emb.dtype).itemsize
    sub = _sublane_multiple(emb.dtype)

    if tile_rows is None:
        # Budget one output block against the smallest-VMEM chip (v7x: 64 MiB
        # physical / 32 MiB default scoped), leaving room for double-buffering.
        per_buffer_budget = 12 * 1024 * 1024
        tile_rows = min(512, max(sub, per_buffer_budget // max(emb_size * itemsize, 1)))
    # Keep the tile sublane-dense and never larger than the (rounded-up) index count.
    tile_rows = max(sub, (min(tile_rows, -(-n_idx // sub) * sub) // sub) * sub)

    n_tiles = -(-n_idx // tile_rows)
    n_pad = n_tiles * tile_rows

    # Range-check indices (unchecked data-dependent DMA otherwise) and pad to a
    # whole number of tiles so every in-kernel SMEM read / DMA is in-bounds.
    idx = jnp.clip(node_index.astype(jnp.int32), 0, n_nodes - 1)
    if n_pad != n_idx:
        idx = jnp.concatenate([idx, jnp.zeros((n_pad - n_idx,), jnp.int32)])

    grid_spec = pltpu.PrefetchScalarGridSpec(
        num_scalar_prefetch=1,
        grid=(n_tiles,),
        in_specs=[pl.BlockSpec(memory_space=pl.ANY)],   # table stays in HBM
        out_specs=pl.BlockSpec((tile_rows, emb_size), lambda i, idx_ref: (i, 0)),
        scratch_shapes=[pltpu.SemaphoreType.DMA(())],
    )

    cost = pl.CostEstimate(
        flops=0, transcendentals=0,
        bytes_accessed=2 * n_idx * emb_size * itemsize)

    out = pl.pallas_call(
        _make_gather_kernel(tile_rows),
        grid_spec=grid_spec,
        out_shape=jax.ShapeDtypeStruct((n_pad, emb_size), emb.dtype),
        compiler_params=pltpu.CompilerParams(
            dimension_semantics=("parallel",)),   # rows independent; v7x 2-TC split
        cost_estimate=cost,
    )(idx, emb)

    return out if n_pad == n_idx else out[:n_idx]


# --------------------------- Module equivalent -------------------------------
class StaticGraphEmbedding:
    """JAX/Pallas port of the PyTorch StaticGraphEmbedding module."""

    def __init__(self, n_nodes: int, emb_size: int, key=None,
                 initializer="uniform", default_values: Optional[jax.Array] = None):
        self.n_nodes = int(n_nodes)
        self.emb_size = int(emb_size)
        # Note: keeping emb_size a multiple of 128 keeps every row DMA lane-dense.
        if initializer == "uniform" or initializer is None:
            bound = 1.0 / math.sqrt(self.emb_size)
            key = key if key is not None else jax.random.PRNGKey(0)
            self.emb = jax.random.uniform(
                key, (self.n_nodes, self.emb_size),
                minval=-bound, maxval=bound, dtype=jnp.float32)
        elif initializer == "from_values":
            self.emb = jnp.asarray(default_values, dtype=jnp.float32)
        else:
            raise RuntimeError(
                f"Embedding initializer '{initializer}' is not supported.")
        # TODO(synk): requires_grad / nn.Parameter training semantics are not
        # represented; the table is a plain jnp array.

    def get_emb(self):
        return self.emb

    def forward(self,
                expand: Optional[List[int]] = None,
                node_index: Optional[jax.Array] = None,
                nodes_first: bool = True,
                use_pallas: Optional[bool] = None) -> jax.Array:
        emb = self.get_emb()
        if node_index is not None:
            node_index = jnp.asarray(node_index)
            if node_index.ndim != 1:
                use_pallas = False            # fancy multi-dim indexing: XLA path
            if use_pallas is None:
                # Tiny gathers: fixed pallas_call overhead loses to XLA gather.
                gathered_bytes = (node_index.size * self.emb_size
                                  * emb.dtype.itemsize)
                use_pallas = gathered_bytes >= (1 << 20)
            emb = (gather_embeddings(emb, node_index) if use_pallas
                   else emb[node_index])
        if not nodes_first:
            emb = emb.T
        if expand is None:
            return emb
        # torch semantics: positive d -> new broadcast dim; non-positive d ->
        # consume the next original dim (front if nodes_first else back).
        shape = list(emb.shape)
        view = [1 if d > 0 else shape.pop(0 if nodes_first else -1)
                for d in expand]
        target = [d if d > 0 else v for d, v in zip(expand, view)]
        # TODO(synk): torch .view errors on the non-contiguous transposed emb
        # (nodes_first=False with expand); we use row-major reshape semantics.
        return jnp.broadcast_to(emb.reshape(view), target)

    __call__ = forward


# --------------------------------- Demo --------------------------------------
if __name__ == "__main__":
    key = jax.random.PRNGKey(0)
    k_emb, k_idx = jax.random.split(key)

    n_nodes, emb_size, seq = 16, 128, 8
    module = StaticGraphEmbedding(n_nodes, emb_size, key=k_emb)
    node_index = jax.random.randint(k_idx, (seq,), 0, n_nodes, dtype=jnp.int32)
    ref = module.get_emb()[node_index]

    # 1) Row gather through the Pallas kernel (forced on; the auto heuristic
    #    would route demo-small inputs to the XLA-gather fast path).
    out = jax.block_until_ready(module(node_index=node_index, use_pallas=True))
    assert out.shape == (seq, emb_size)
    assert jnp.allclose(out, ref), "Pallas gather mismatch"

    # 2) Gather + expand with nodes_first=True:
    #    torch: emb.view(1, seq, emb_size).expand(2, -1, -1) -> (2, seq, emb_size)
    out_exp = jax.block_until_ready(
        module(expand=[2, -1, -1], node_index=node_index, use_pallas=True))
    assert out_exp.shape == (2, seq, emb_size)
    assert jnp.allclose(out_exp[0], ref) and jnp.allclose(out_exp[1], ref)

    # 3) nodes_first=False (pure transpose of the gathered rows).
    out_t = jax.block_until_ready(
        module(node_index=node_index, nodes_first=False, use_pallas=True))
    assert out_t.shape == (emb_size, seq)
    assert jnp.allclose(out_t, ref.T)

    # 4) Remainder handling: n_idx not a multiple of the sublane tile.
    out_rem = jax.block_until_ready(
        module(node_index=node_index[:5], use_pallas=True))
    assert out_rem.shape == (5, emb_size)
    assert jnp.allclose(out_rem, ref[:5])

    # 5) Auto path (small input -> XLA gather fast path), same result.
    out_auto = jax.block_until_ready(module(node_index=node_index))
    assert jnp.allclose(out_auto, ref)

    print("KERNEL_OK")
</pallas_src>

<mosaic_0001>
module attributes {stable_mosaic.version = 11 : i64} {
  func.func @kernel(%arg0: i32, %arg1: memref<8xi32, #tpu.memory_space<smem>>, %arg2: memref<16x128xf32, #tpu.memory_space<any>>, %arg3: memref<8x128xf32, #tpu.memory_space<vmem>>, %arg4: memref<!tpu.dma_semaphore, #tpu.memory_space<semaphore_mem>>) attributes {dimension_semantics = [#tpu.dimension_semantics<parallel>], iteration_bounds = array<i64: 1>, scalar_prefetch = 1 : i64, scratch_operands = 1 : i64, tpu.core_type = #tpu.core_type<tc>, window_params = [{}, {transform_indices = @transform_1, window_bounds = array<i64: 8, 128>}]} {
    %c8_i32 = arith.constant 8 : i32
    %0 = arith.muli %arg0, %c8_i32 : i32
    %c0_i32 = arith.constant 0 : i32
    %1 = arith.addi %0, %c0_i32 : i32
    %2 = arith.index_cast %1 : i32 to index
    %3 = memref.load %arg1[%2] : memref<8xi32, #tpu.memory_space<smem>>
    %c0_i32_0 = arith.constant 0 : i32
    %4 = tpu.memref_slice %arg2[%3, %c0_i32_0] : memref<16x128xf32, #tpu.memory_space<any>> -> memref<1x128xf32, #tpu.memory_space<any>>
    %5 = tpu.memref_squeeze %4 : memref<1x128xf32, #tpu.memory_space<any>> -> memref<128xf32, #tpu.memory_space<any>>
    %c0_i32_1 = arith.constant 0 : i32
    %6 = tpu.memref_slice %arg3[%c0_i32, %c0_i32_1] : memref<8x128xf32, #tpu.memory_space<vmem>> -> memref<1x128xf32, #tpu.memory_space<vmem>>
    %7 = tpu.memref_squeeze %6 : memref<1x128xf32, #tpu.memory_space<vmem>> -> memref<128xf32, #tpu.memory_space<vmem>>
    tpu.enqueue_dma source(%5 : memref<128xf32, #tpu.memory_space<any>>) target(%7 : memref<128xf32, #tpu.memory_space<vmem>>) target_semaphore(%arg4 : memref<!tpu.dma_semaphore, #tpu.memory_space<semaphore_mem>>)
    %c1_i32 = arith.constant 1 : i32
    %8 = arith.addi %0, %c1_i32 : i32
    %9 = arith.index_cast %8 : i32 to index
    %10 = memref.load %arg1[%9] : memref<8xi32, #tpu.memory_space<smem>>
    %c0_i32_2 = arith.constant 0 : i32
    %11 = tpu.memref_slice %arg2[%10, %c0_i32_2] : memref<16x128xf32, #tpu.memory_space<any>> -> memref<1x128xf32, #tpu.memory_space<any>>
    %12 = tpu.memref_squeeze %11 : memref<1x128xf32, #tpu.memory_space<any>> -> memref<128xf32, #tpu.memory_space<any>>
    %c0_i32_3 = arith.constant 0 : i32
    %13 = tpu.memref_slice %arg3[%c1_i32, %c0_i32_3] : memref<8x128xf32, #tpu.memory_space<vmem>> -> memref<1x128xf32, #tpu.memory_space<vmem>>
    %14 = tpu.memref_squeeze %13 : memref<1x128xf32, #tpu.memory_space<vmem>> -> memref<128xf32, #tpu.memory_space<vmem>>
    tpu.enqueue_dma source(%12 : memref<128xf32, #tpu.memory_space<any>>) target(%14 : memref<128xf32, #tpu.memory_space<vmem>>) target_semaphore(%arg4 : memref<!tpu.dma_semaphore, #tpu.memory_space<semaphore_mem>>)
    %c2_i32 = arith.constant 2 : i32
    %15 = arith.addi %0, %c2_i32 : i32
    %16 = arith.index_cast %15 : i32 to index
    %17 = memref.load %arg1[%16] : memref<8xi32, #tpu.memory_space<smem>>
    %c0_i32_4 = arith.constant 0 : i32
    %18 = tpu.memref_slice %arg2[%17, %c0_i32_4] : memref<16x128xf32, #tpu.memory_space<any>> -> memref<1x128xf32, #tpu.memory_space<any>>
    %19 = tpu.memref_squeeze %18 : memref<1x128xf32, #tpu.memory_space<any>> -> memref<128xf32, #tpu.memory_space<any>>
    %c0_i32_5 = arith.constant 0 : i32
    %20 = tpu.memref_slice %arg3[%c2_i32, %c0_i32_5] : memref<8x128xf32, #tpu.memory_space<vmem>> -> memref<1x128xf32, #tpu.memory_space<vmem>>
    %21 = tpu.memref_squeeze %20 : memref<1x128xf32, #tpu.memory_space<vmem>> -> memref<128xf32, #tpu.memory_space<vmem>>
    tpu.enqueue_dma source(%19 : memref<128xf32, #tpu.memory_space<any>>) target(%21 : memref<128xf32, #tpu.memory_space<vmem>>) target_semaphore(%arg4 : memref<!tpu.dma_semaphore, #tpu.memory_space<semaphore_mem>>)
    %c3_i32 = arith.constant 3 : i32
    %22 = arith.addi %0, %c3_i32 : i32
    %23 = arith.index_cast %22 : i32 to index
    %24 = memref.load %arg1[%23] : memref<8xi32, #tpu.memory_space<smem>>
    %c0_i32_6 = arith.constant 0 : i32
    %25 = tpu.memref_slice %arg2[%24, %c0_i32_6] : memref<16x128xf32, #tpu.memory_space<any>> -> memref<1x128xf32, #tpu.memory_space<any>>
    %26 = tpu.memref_squeeze %25 : memref<1x128xf32, #tpu.memory_space<any>> -> memref<128xf32, #tpu.memory_space<any>>
    %c0_i32_7 = arith.constant 0 : i32
    %27 = tpu.memref_slice %arg3[%c3_i32, %c0_i32_7] : memref<8x128xf32, #tpu.memory_space<vmem>> -> memref<1x128xf32, #tpu.memory_space<vmem>>
    %28 = tpu.memref_squeeze %27 : memref<1x128xf32, #tpu.memory_space<vmem>> -> memref<128xf32, #tpu.memory_space<vmem>>
    tpu.enqueue_dma source(%26 : memref<128xf32, #tpu.memory_space<any>>) target(%28 : memref<128xf32, #tpu.memory_space<vmem>>) target_semaphore(%arg4 : memref<!tpu.dma_semaphore, #tpu.memory_space<semaphore_mem>>)
    %c4_i32 = arith.constant 4 : i32
    %29 = arith.addi %0, %c4_i32 : i32
    %30 = arith.index_cast %29 : i32 to index
    %31 = memref.load %arg1[%30] : memref<8xi32, #tpu.memory_space<smem>>
    %c0_i32_8 = arith.constant 0 : i32
    %32 = tpu.memref_slice %arg2[%31, %c0_i32_8] : memref<16x128xf32, #tpu.memory_space<any>> -> memref<1x128xf32, #tpu.memory_space<any>>
    %33 = tpu.memref_squeeze %32 : memref<1x128xf32, #tpu.memory_space<any>> -> memref<128xf32, #tpu.memory_space<any>>
    %c0_i32_9 = arith.constant 0 : i32
    %34 = tpu.memref_slice %arg3[%c4_i32, %c0_i32_9] : memref<8x128xf32, #tpu.memory_space<vmem>> -> memref<1x128xf32, #tpu.memory_space<vmem>>
    %35 = tpu.memref_squeeze %34 : memref<1x128xf32, #tpu.memory_space<vmem>> -> memref<128xf32, #tpu.memory_space<vmem>>
    tpu.enqueue_dma source(%33 : memref<128xf32, #tpu.memory_space<any>>) target(%35 : memref<128xf32, #tpu.memory_space<vmem>>) target_semaphore(%arg4 : memref<!tpu.dma_semaphore, #tpu.memory_space<semaphore_mem>>)
    %c5_i32 = arith.constant 5 : i32
    %36 = arith.addi %0, %c5_i32 : i32
    %37 = arith.index_cast %36 : i32 to index
    %38 = memref.load %arg1[%37] : memref<8xi32, #tpu.memory_space<smem>>
    %c0_i32_10 = arith.constant 0 : i32
    %39 = tpu.memref_slice %arg2[%38, %c0_i32_10] : memref<16x128xf32, #tpu.memory_space<any>> -> memref<1x128xf32, #tpu.memory_space<any>>
    %40 = tpu.memref_squeeze %39 : memref<1x128xf32, #tpu.memory_space<any>> -> memref<128xf32, #tpu.memory_space<any>>
    %c0_i32_11 = arith.constant 0 : i32
    %41 = tpu.memref_slice %arg3[%c5_i32, %c0_i32_11] : memref<8x128xf32, #tpu.memory_space<vmem>> -> memref<1x128xf32, #tpu.memory_space<vmem>>
    %42 = tpu.memref_squeeze %41 : memref<1x128xf32, #tpu.memory_space<vmem>> -> memref<128xf32, #tpu.memory_space<vmem>>
    tpu.enqueue_dma source(%40 : memref<128xf32, #tpu.memory_space<any>>) target(%42 : memref<128xf32, #tpu.memory_space<vmem>>) target_semaphore(%arg4 : memref<!tpu.dma_semaphore, #tpu.memory_space<semaphore_mem>>)
    %c6_i32 = arith.constant 6 : i32
    %43 = arith.addi %0, %c6_i32 : i32
    %44 = arith.index_cast %43 : i32 to index
    %45 = memref.load %arg1[%44] : memref<8xi32, #tpu.memory_space<smem>>
    %c0_i32_12 = arith.constant 0 : i32
    %46 = tpu.memref_slice %arg2[%45, %c0_i32_12] : memref<16x128xf32, #tpu.memory_space<any>> -> memref<1x128xf32, #tpu.memory_space<any>>
    %47 = tpu.memref_squeeze %46 : memref<1x128xf32, #tpu.memory_space<any>> -> memref<128xf32, #tpu.memory_space<any>>
    %c0_i32_13 = arith.constant 0 : i32
    %48 = tpu.memref_slice %arg3[%c6_i32, %c0_i32_13] : memref<8x128xf32, #tpu.memory_space<vmem>> -> memref<1x128xf32, #tpu.memory_space<vmem>>
    %49 = tpu.memref_squeeze %48 : memref<1x128xf32, #tpu.memory_space<vmem>> -> memref<128xf32, #tpu.memory_space<vmem>>
    tpu.enqueue_dma source(%47 : memref<128xf32, #tpu.memory_space<any>>) target(%49 : memref<128xf32, #tpu.memory_space<vmem>>) target_semaphore(%arg4 : memref<!tpu.dma_semaphore, #tpu.memory_space<semaphore_mem>>)
    %c7_i32 = arith.constant 7 : i32
    %50 = arith.addi %0, %c7_i32 : i32
    %51 = arith.index_cast %50 : i32 to index
    %52 = memref.load %arg1[%51] : memref<8xi32, #tpu.memory_space<smem>>
    %c0_i32_14 = arith.constant 0 : i32
    %53 = tpu.memref_slice %arg2[%52, %c0_i32_14] : memref<16x128xf32, #tpu.memory_space<any>> -> memref<1x128xf32, #tpu.memory_space<any>>
    %54 = tpu.memref_squeeze %53 : memref<1x128xf32, #tpu.memory_space<any>> -> memref<128xf32, #tpu.memory_space<any>>
    %c0_i32_15 = arith.constant 0 : i32
    %55 = tpu.memref_slice %arg3[%c7_i32, %c0_i32_15] : memref<8x128xf32, #tpu.memory_space<vmem>> -> memref<1x128xf32, #tpu.memory_space<vmem>>
    %56 = tpu.memref_squeeze %55 : memref<1x128xf32, #tpu.memory_space<vmem>> -> memref<128xf32, #tpu.memory_space<vmem>>
    tpu.enqueue_dma source(%54 : memref<128xf32, #tpu.memory_space<any>>) target(%56 : memref<128xf32, #tpu.memory_space<vmem>>) target_semaphore(%arg4 : memref<!tpu.dma_semaphore, #tpu.memory_space<semaphore_mem>>)
    %c8_i32_16 = arith.constant 8 : i32
    %c0_i32_17 = arith.constant 0 : i32
    %c0_i32_18 = arith.constant 0 : i32
    %c0_i32_19 = arith.constant 0 : i32
    %c0_i32_20 = arith.constant 0 : i32
    %57 = tpu.memref_slice %arg2[%c0_i32_18, %c0_i32_20] : memref<16x128xf32, #tpu.memory_space<any>> -> memref<1x128xf32, #tpu.memory_space<any>>
    %58 = tpu.memref_squeeze %57 : memref<1x128xf32, #tpu.memory_space<any>> -> memref<128xf32, #tpu.memory_space<any>>
    %c0_i32_21 = arith.constant 0 : i32
    %59 = tpu.memref_slice %arg3[%c0_i32_19, %c0_i32_21] : memref<8x128xf32, #tpu.memory_space<vmem>> -> memref<1x128xf32, #tpu.memory_space<vmem>>
    %60 = tpu.memref_squeeze %59 : memref<1x128xf32, #tpu.memory_space<vmem>> -> memref<128xf32, #tpu.memory_space<vmem>>
    tpu.wait_dma2 semaphore(%arg4 : memref<!tpu.dma_semaphore, #tpu.memory_space<semaphore_mem>>) src(%58 : memref<128xf32, #tpu.memory_space<any>>) dst(%60 : memref<128xf32, #tpu.memory_space<vmem>>)
    %c1_i32_22 = arith.constant 1 : i32
    %c0_i32_23 = arith.constant 0 : i32
    %c0_i32_24 = arith.constant 0 : i32
    %c0_i32_25 = arith.constant 0 : i32
    %61 = tpu.memref_slice %arg2[%c0_i32_23, %c0_i32_25] : memref<16x128xf32, #tpu.memory_space<any>> -> memref<1x128xf32, #tpu.memory_space<any>>
    %62 = tpu.memref_squeeze %61 : memref<1x128xf32, #tpu.memory_space<any>> -> memref<128xf32, #tpu.memory_space<any>>
    %c0_i32_26 = arith.constant 0 : i32
    %63 = tpu.memref_slice %arg3[%c0_i32_24, %c0_i32_26] : memref<8x128xf32, #tpu.memory_space<vmem>> -> memref<1x128xf32, #tpu.memory_space<vmem>>
    %64 = tpu.memref_squeeze %63 : memref<1x128xf32, #tpu.memory_space<vmem>> -> memref<128xf32, #tpu.memory_space<vmem>>
    tpu.wait_dma2 semaphore(%arg4 : memref<!tpu.dma_semaphore, #tpu.memory_space<semaphore_mem>>) src(%62 : memref<128xf32, #tpu.memory_space<any>>) dst(%64 : memref<128xf32, #tpu.memory_space<vmem>>)
    %c2_i32_27 = arith.constant 2 : i32
    %c0_i32_28 = arith.constant 0 : i32
    %c0_i32_29 = arith.constant 0 : i32
    %c0_i32_30 = arith.constant 0 : i32
    %65 = tpu.memref_slice %arg2[%c0_i32_28, %c0_i32_30] : memref<16x128xf32, #tpu.memory_space<any>> -> memref<1x128xf32, #tpu.memory_space<any>>
    %66 = tpu.memref_squeeze %65 : memref<1x128xf32, #tpu.memory_space<any>> -> memref<128xf32, #tpu.memory_space<any>>
    %c0_i32_31 = arith.constant 0 : i32
    %67 = tpu.memref_slice %arg3[%c0_i32_29, %c0_i32_31] : memref<8x128xf32, #tpu.memory_space<vmem>> -> memref<1x128xf32, #tpu.memory_space<vmem>>
    %68 = tpu.memref_squeeze %67 : memref<1x128xf32, #tpu.memory_space<vmem>> -> memref<128xf32, #tpu.memory_space<vmem>>
    tpu.wait_dma2 semaphore(%arg4 : memref<!tpu.dma_semaphore, #tpu.memory_space<semaphore_mem>>) src(%66 : memref<128xf32, #tpu.memory_space<any>>) dst(%68 : memref<128xf32, #tpu.memory_space<vmem>>)
    %c3_i32_32 = arith.constant 3 : i32
    %c0_i32_33 = arith.constant 0 : i32
    %c0_i32_34 = arith.constant 0 : i32
    %c0_i32_35 = arith.constant 0 : i32
    %69 = tpu.memref_slice %arg2[%c0_i32_33, %c0_i32_35] : memref<16x128xf32, #tpu.memory_space<any>> -> memref<1x128xf32, #tpu.memory_space<any>>
    %70 = tpu.memref_squeeze %69 : memref<1x128xf32, #tpu.memory_space<any>> -> memref<128xf32, #tpu.memory_space<any>>
    %c0_i32_36 = arith.constant 0 : i32
    %71 = tpu.memref_slice %arg3[%c0_i32_34, %c0_i32_36] : memref<8x128xf32, #tpu.memory_space<vmem>> -> memref<1x128xf32, #tpu.memory_space<vmem>>
    %72 = tpu.memref_squeeze %71 : memref<1x128xf32, #tpu.memory_space<vmem>> -> memref<128xf32, #tpu.memory_space<vmem>>
    tpu.wait_dma2 semaphore(%arg4 : memref<!tpu.dma_semaphore, #tpu.memory_space<semaphore_mem>>) src(%70 : memref<128xf32, #tpu.memory_space<any>>) dst(%72 : memref<128xf32, #tpu.memory_space<vmem>>)
    %c4_i32_37 = arith.constant 4 : i32
    %c0_i32_38 = arith.constant 0 : i32
    %c0_i32_39 = arith.constant 0 : i32
    %c0_i32_40 = arith.constant 0 : i32
    %73 = tpu.memref_slice %arg2[%c0_i32_38, %c0_i32_40] : memref<16x128xf32, #tpu.memory_space<any>> -> memref<1x128xf32, #tpu.memory_space<any>>
    %74 = tpu.memref_squeeze %73 : memref<1x128xf32, #tpu.memory_space<any>> -> memref<128xf32, #tpu.memory_space<any>>
    %c0_i32_41 = arith.constant 0 : i32
    %75 = tpu.memref_slice %arg3[%c0_i32_39, %c0_i32_41] : memref<8x128xf32, #tpu.memory_space<vmem>> -> memref<1x128xf32, #tpu.memory_space<vmem>>
    %76 = tpu.memref_squeeze %75 : memref<1x128xf32, #tpu.memory_space<vmem>> -> memref<128xf32, #tpu.memory_space<vmem>>
    tpu.wait_dma2 semaphore(%arg4 : memref<!tpu.dma_semaphore, #tpu.memory_space<semaphore_mem>>) src(%74 : memref<128xf32, #tpu.memory_space<any>>) dst(%76 : memref<128xf32, #tpu.memory_space<vmem>>)
    %c5_i32_42 = arith.constant 5 : i32
    %c0_i32_43 = arith.constant 0 : i32
    %c0_i32_44 = arith.constant 0 : i32
    %c0_i32_45 = arith.constant 0 : i32
    %77 = tpu.memref_slice %arg2[%c0_i32_43, %c0_i32_45] : memref<16x128xf32, #tpu.memory_space<any>> -> memref<1x128xf32, #tpu.memory_space<any>>
    %78 = tpu.memref_squeeze %77 : memref<1x128xf32, #tpu.memory_space<any>> -> memref<128xf32, #tpu.memory_space<any>>
    %c0_i32_46 = arith.constant 0 : i32
    %79 = tpu.memref_slice %arg3[%c0_i32_44, %c0_i32_46] : memref<8x128xf32, #tpu.memory_space<vmem>> -> memref<1x128xf32, #tpu.memory_space<vmem>>
    %80 = tpu.memref_squeeze %79 : memref<1x128xf32, #tpu.memory_space<vmem>> -> memref<128xf32, #tpu.memory_space<vmem>>
    tpu.wait_dma2 semaphore(%arg4 : memref<!tpu.dma_semaphore, #tpu.memory_space<semaphore_mem>>) src(%78 : memref<128xf32, #tpu.memory_space<any>>) dst(%80 : memref<128xf32, #tpu.memory_space<vmem>>)
    %c6_i32_47 = arith.constant 6 : i32
    %c0_i32_48 = arith.constant 0 : i32
    %c0_i32_49 = arith.constant 0 : i32
    %c0_i32_50 = arith.constant 0 : i32
    %81 = tpu.memref_slice %arg2[%c0_i32_48, %c0_i32_50] : memref<16x128xf32, #tpu.memory_space<any>> -> memref<1x128xf32, #tpu.memory_space<any>>
    %82 = tpu.memref_squeeze %81 : memref<1x128xf32, #tpu.memory_space<any>> -> memref<128xf32, #tpu.memory_space<any>>
    %c0_i32_51 = arith.constant 0 : i32
    %83 = tpu.memref_slice %arg3[%c0_i32_49, %c0_i32_51] : memref<8x128xf32, #tpu.memory_space<vmem>> -> memref<1x128xf32, #tpu.memory_space<vmem>>
    %84 = tpu.memref_squeeze %83 : memref<1x128xf32, #tpu.memory_space<vmem>> -> memref<128xf32, #tpu.memory_space<vmem>>
    tpu.wait_dma2 semaphore(%arg4 : memref<!tpu.dma_semaphore, #tpu.memory_space<semaphore_mem>>) src(%82 : memref<128xf32, #tpu.memory_space<any>>) dst(%84 : memref<128xf32, #tpu.memory_space<vmem>>)
    %c7_i32_52 = arith.constant 7 : i32
    %c0_i32_53 = arith.constant 0 : i32
    %c0_i32_54 = arith.constant 0 : i32
    %c0_i32_55 = arith.constant 0 : i32
    %85 = tpu.memref_slice %arg2[%c0_i32_53, %c0_i32_55] : memref<16x128xf32, #tpu.memory_space<any>> -> memref<1x128xf32, #tpu.memory_space<any>>
    %86 = tpu.memref_squeeze %85 : memref<1x128xf32, #tpu.memory_space<any>> -> memref<128xf32, #tpu.memory_space<any>>
    %c0_i32_56 = arith.constant 0 : i32
    %87 = tpu.memref_slice %arg3[%c0_i32_54, %c0_i32_56] : memref<8x128xf32, #tpu.memory_space<vmem>> -> memref<1x128xf32, #tpu.memory_space<vmem>>
    %88 = tpu.memref_squeeze %87 : memref<1x128xf32, #tpu.memory_space<vmem>> -> memref<128xf32, #tpu.memory_space<vmem>>
    tpu.wait_dma2 semaphore(%arg4 : memref<!tpu.dma_semaphore, #tpu.memory_space<semaphore_mem>>) src(%86 : memref<128xf32, #tpu.memory_space<any>>) dst(%88 : memref<128xf32, #tpu.memory_space<vmem>>)
    return
  }
  func.func @transform_1(%arg0: i32, %arg1: memref<8xi32, #tpu.memory_space<smem>>) -> (i32, i32) {
    %c0_i32 = arith.constant 0 : i32
    %c0_i32_0 = arith.constant 0 : i32
    return %arg0, %c0_i32 : i32, i32
  }
}

</mosaic_0001>

<llo_original>
// kernel: tpu_custom_call.1
$region0: #{tpu_custom_call.1}
  #allocation0 [shape = 'u32[]', space=smem, size = 0x4, offset = 0x4, fixed_abs, tag = 'smem constant byte address 0x4 - core index']
  #allocation1 [shape = 'u32[144,128]{1,0:T(1,128)}', space=vmem, size = 0x12000, scoped, tag = 'internal scratch']
  #allocation2 [shape = 's32[1]{0}', space=sflag, size = 0x4, scoped, tag = 'scratch operand']
  #allocation3 [shape = 's32[1]{0}', space=sflag, size = 0x4, scoped, tag = 'scoped memory for tpu_custom_call.1']
  #allocation4 [shape = 'u8[512]{0}', space=smem, size = 0x200, scoped, tag = 'prefetched SMEM operand 0']
  #allocation7 [shape = 's32[]', space=sflag, size = 0x4, offset = 0, fixed_abs, tag = 'sflag constant byte address 0x0 - dummy sync flag']
  #allocation8 [shape = 's32[]', space=sflag, size = 0x4, offset = 0, fixed_abs, tag = 'sflag constant byte address 0x0 - dummy sync flag']
  #allocation9 [shape = 'u32[]', space=smem, size = 0x4, offset = 0x44, fixed_abs, tag = 'smem constant byte address 0x44 - assertion arg 0']
  #allocation10 [shape = 'u32[]', space=smem, size = 0x4, offset = 0x48, fixed_abs, tag = 'smem constant byte address 0x48 - assertion arg 1']
  #allocation11 [shape = 's32[]', space=sflag, size = 0x4, offset = 0, fixed_abs, tag = 'sflag constant byte address 0x0 - dummy sync flag']
  #allocation12 [shape = 's32[]', space=sflag, size = 0x4, offset = 0, fixed_abs, tag = 'sflag constant byte address 0x0 - dummy sync flag']
  #allocation13 [shape = 's32[]', space=sflag, size = 0x4, offset = 0, fixed_abs, tag = 'sflag constant byte address 0x0 - dummy sync flag']
  #allocation14 [shape = 's32[]', space=sflag, size = 0x4, offset = 0, fixed_abs, tag = 'sflag constant byte address 0x0 - dummy sync flag']
  #allocation15 [shape = 's32[]', space=sflag, size = 0x4, offset = 0, fixed_abs, tag = 'sflag constant byte address 0x0 - dummy sync flag']
  #allocation16 [shape = 's32[]', space=sflag, size = 0x4, offset = 0, fixed_abs, tag = 'sflag constant byte address 0x0 - dummy sync flag']
  #allocation17 [shape = 's32[]', space=sflag, size = 0x4, offset = 0, fixed_abs, tag = 'sflag constant byte address 0x0 - dummy sync flag']
  #allocation18 [shape = 's32[]', space=sflag, size = 0x4, offset = 0, fixed_abs, tag = 'sflag constant byte address 0x0 - dummy sync flag']
  #allocation19 [shape = 's32[]', space=sflag, size = 0x4, offset = 0, fixed_abs, tag = 'sflag constant byte address 0x0 - dummy sync flag']
  #allocation20 [shape = 's32[]', space=sflag, size = 0x4, offset = 0, fixed_abs, tag = 'sflag constant byte address 0x0 - dummy sync flag']
  #allocation21 [shape = 's32[]', space=sflag, size = 0x4, offset = 0, fixed_abs, tag = 'sflag constant byte address 0x0 - dummy sync flag']
  #allocation22 [shape = 's32[]', space=sflag, size = 0x4, offset = 0, fixed_abs, tag = 'sflag constant byte address 0x0 - dummy sync flag']
  #allocation23 [shape = 's32[]', space=sflag, size = 0x4, offset = 0, fixed_abs, tag = 'sflag constant byte address 0x0 - dummy sync flag']
  #allocation24 [shape = 's32[]', space=sflag, size = 0x4, offset = 0, fixed_abs, tag = 'sflag constant byte address 0x0 - dummy sync flag']
  %s0 = inlined_call_operand.hbm [shape: s32[8], index: 0, kind: input, shape index: {}]
  %s1 = inlined_call_operand.hbm [shape: f32[16,128], index: 1, kind: input, shape index: {}]
  %s2 = inlined_call_operand.hbm [shape: f32[8,128], index: 2, kind: output, shape index: {}]
  %s3 = sld [smem:[#allocation0]]
  $region42: #{tpu_custom_call.1} parent=0
    _
  %s5 = ssub.s32 1, %s3
  %s6 = scalar_select 0, %s5, %s3
  %8 = dma.hbm_to_smem %s0, 16, [#allocation4], [#allocation3]
  %9 = dma.done [#allocation3], 16
  %10 = sfence
  $region1: #{tpu_custom_call.1} parent=0
    #allocation5 [shape = 'u8[4096]{0}', space=vmem, size = 0x1000, scoped, tag = 'output window, operand 0, single buffered']
    #allocation6 [shape = 's32[1]{0}', space=sflag, size = 0x4, scoped, tag = 'scoped memory for tpu_custom_call.1']
    %11 = vsyncpa [#allocation6], 0
    %s12 = smul.u32 0, 8
    %s13 = sld [smem:[#allocation4 + %s12]]
    %s14 = smul.addr %s13, 16
    %s15 = scalar_lea.hbm %s1, %s14
    // Predicated region
    $region2: #{tpu_custom_call.1} parent=1 // pred_check
      _
    $region3: #{tpu_custom_call.1} parent=1 // pred_check_branch
      %17 = sbr.rel target = $region5
    $region4: #{tpu_custom_call.1} parent=1 // pred_region
      %18 = sst [smem:[#allocation9]] [#allocation8]
      %19 = sst [smem:[#allocation10]] [#allocation7]
    $region5: #{tpu_custom_call.1} parent=1 // pred_fallthru
      _
    %21 = shalt.err (0)
    %s23 = sshll.u32 [#allocation5], 4
    %s24 = int_to_ptr.vmem [resolvable:$true] %s23
    %26 = dma.hbm_to_vmem [thread:$0]  %s15, 16, %s24, [#allocation2]
    %s27 = sadd.s32 %s12, 1
    %s28 = sld [smem:[#allocation4 + %s27]]
    %s29 = smul.addr %s28, 16
    %s30 = scalar_lea.hbm %s1, %s29
    %s31 = scalar_lea.vmem [#allocation5], 1
    // Predicated region
    $region6: #{tpu_custom_call.1} parent=1 // pred_check
      _
    $region7: #{tpu_custom_call.1} parent=1 // pred_check_branch
      %33 = sbr.rel target = $region9
    $region8: #{tpu_custom_call.1} parent=1 // pred_region
      %34 = sst [smem:[#allocation9]] [#allocation12]
      %35 = sst [smem:[#allocation10]] [#allocation11]
    $region9: #{tpu_custom_call.1} parent=1 // pred_fallthru
      _
    %37 = shalt.err (0)
    %s39 = sshll.u32 %s31, 4
    %s40 = int_to_ptr.vmem [resolvable:$true] %s39
    %42 = dma.hbm_to_vmem [thread:$0]  %s30, 16, %s40, [#allocation2]
    %s43 = sadd.s32 %s12, 2
    %s44 = sld [smem:[#allocation4 + %s43]]
    %s45 = smul.addr %s44, 16
    %s46 = scalar_lea.hbm %s1, %s45
    %s47 = scalar_lea.vmem [#allocation5], 2
    // Predicated region
    $region10: #{tpu_custom_call.1} parent=1 // pred_check
      _
    $region11: #{tpu_custom_call.1} parent=1 // pred_check_branch
      %49 = sbr.rel target = $region13
    $region12: #{tpu_custom_call.1} parent=1 // pred_region
      %50 = sst [smem:[#allocation9]] [#allocation14]
      %51 = sst [smem:[#allocation10]] [#allocation13]
    $region13: #{tpu_custom_call.1} parent=1 // pred_fallthru
      _
    %53 = shalt.err (0)
    %s55 = sshll.u32 %s47, 4
    %s56 = int_to_ptr.vmem [resolvable:$true] %s55
    %58 = dma.hbm_to_vmem [thread:$0]  %s46, 16, %s56, [#allocation2]
    %s59 = sadd.s32 %s12, 3
    %s60 = sld [smem:[#allocation4 + %s59]]
    %s61 = smul.addr %s60, 16
    %s62 = scalar_lea.hbm %s1, %s61
    %s63 = scalar_lea.vmem [#allocation5], 3
    // Predicated region
    $region14: #{tpu_custom_call.1} parent=1 // pred_check
      _
    $region15: #{tpu_custom_call.1} parent=1 // pred_check_branch
      %65 = sbr.rel target = $region17
    $region16: #{tpu_custom_call.1} parent=1 // pred_region
      %66 = sst [smem:[#allocation9]] [#allocation16]
      %67 = sst [smem:[#allocation10]] [#allocation15]
    $region17: #{tpu_custom_call.1} parent=1 // pred_fallthru
      _
    %69 = shalt.err (0)
    %s71 = sshll.u32 %s63, 4
    %s72 = int_to_ptr.vmem [resolvable:$true] %s71
    %74 = dma.hbm_to_vmem [thread:$0]  %s62, 16, %s72, [#allocation2]
    %s75 = sadd.s32 %s12, 4
    %s76 = sld [smem:[#allocation4 + %s75]]
    %s77 = smul.addr %s76, 16
    %s78 = scalar_lea.hbm %s1, %s77
    %s79 = scalar_lea.vmem [#allocation5], 4
    // Predicated region
    $region18: #{tpu_custom_call.1} parent=1 // pred_check
      _
    $region19: #{tpu_custom_call.1} parent=1 // pred_check_branch
      %81 = sbr.rel target = $region21
    $region20: #{tpu_custom_call.1} parent=1 // pred_region
      %82 = sst [smem:[#allocation9]] [#allocation18]
      %83 = sst [smem:[#allocation10]] [#allocation17]
    $region21: #{tpu_custom_call.1} parent=1 // pred_fallthru
      _
    %85 = shalt.err (0)
    %s87 = sshll.u32 %s79, 4
    %s88 = int_to_ptr.vmem [resolvable:$true] %s87
    %90 = dma.hbm_to_vmem [thread:$0]  %s78, 16, %s88, [#allocation2]
    %s91 = sadd.s32 %s12, 5
    %s92 = sld [smem:[#allocation4 + %s91]]
    %s93 = smul.addr %s92, 16
    %s94 = scalar_lea.hbm %s1, %s93
    %s95 = scalar_lea.vmem [#allocation5], 5
    // Predicated region
    $region22: #{tpu_custom_call.1} parent=1 // pred_check
      _
    $region23: #{tpu_custom_call.1} parent=1 // pred_check_branch
      %97 = sbr.rel target = $region25
    $region24: #{tpu_custom_call.1} parent=1 // pred_region
      %98 = sst [smem:[#allocation9]] [#allocation20]
      %99 = sst [smem:[#allocation10]] [#allocation19]
    $region25: #{tpu_custom_call.1} parent=1 // pred_fallthru
      _
    %101 = shalt.err (0)
    %s103 = sshll.u32 %s95, 4
    %s104 = int_to_ptr.vmem [resolvable:$true] %s103
    %106 = dma.hbm_to_vmem [thread:$0]  %s94, 16, %s104, [#allocation2]
    %s107 = sadd.s32 %s12, 6
    %s108 = sld [smem:[#allocation4 + %s107]]
    %s109 = smul.addr %s108, 16
    %s110 = scalar_lea.hbm %s1, %s109
    %s111 = scalar_lea.vmem [#allocation5], 6
    // Predicated region
    $region26: #{tpu_custom_call.1} parent=1 // pred_check
      _
    $region27: #{tpu_custom_call.1} parent=1 // pred_check_branch
      %113 = sbr.rel target = $region29
    $region28: #{tpu_custom_call.1} parent=1 // pred_region
      %114 = sst [smem:[#allocation9]] [#allocation22]
      %115 = sst [smem:[#allocation10]] [#allocation21]
    $region29: #{tpu_custom_call.1} parent=1 // pred_fallthru
      _
    %117 = shalt.err (0)
    %s119 = sshll.u32 %s111, 4
    %s120 = int_to_ptr.vmem [resolvable:$true] %s119
    %122 = dma.hbm_to_vmem [thread:$0]  %s110, 16, %s120, [#allocation2]
    %s123 = sadd.s32 %s12, 7
    %s124 = sld [smem:[#allocation4 + %s123]]
    %s125 = smul.addr %s124, 16
    %s126 = scalar_lea.hbm %s1, %s125
    %s127 = scalar_lea.vmem [#allocation5], 7
    // Predicated region
    $region30: #{tpu_custom_call.1} parent=1 // pred_check
      _
    $region31: #{tpu_custom_call.1} parent=1 // pred_check_branch
      %129 = sbr.rel target = $region33
    $region32: #{tpu_custom_call.1} parent=1 // pred_region
      %130 = sst [smem:[#allocation9]] [#allocation24]
      %131 = sst [smem:[#allocation10]] [#allocation23]
    $region33: #{tpu_custom_call.1} parent=1 // pred_fallthru
      _
    %133 = shalt.err (0)
    %s135 = sshll.u32 %s127, 4
    %s136 = int_to_ptr.vmem [resolvable:$true] %s135
    %138 = dma.hbm_to_vmem [thread:$0]  %s126, 16, %s136, [#allocation2]
    %140 = dma.done [#allocation2], 16
    %142 = dma.done [#allocation2], 16
    %144 = dma.done [#allocation2], 16
    %146 = dma.done [#allocation2], 16
    %148 = dma.done [#allocation2], 16
    %150 = dma.done [#allocation2], 16
    %152 = dma.done [#allocation2], 16
    %154 = dma.done [#allocation2], 16
    // Predicated region
    $region34: #{tpu_custom_call.1} parent=1 // pred_check
      _
    $region35: #{tpu_custom_call.1} parent=1 // pred_check_branch
      %156 = sbr.rel (0) target = $region37
    $region36: #{tpu_custom_call.1} parent=1 // pred_region
      %s158 = ssub.s32 128, 128
      %159 = vsyncadd [#allocation6], %s158
      %s161 = sshll.u32 [#allocation5], 4
      %s162 = int_to_ptr.vmem [resolvable:$true] %s161
      %164 = dma.vmem_to_hbm [thread:$0]  %s162, 128, %s2, [#allocation6]
    $region37: #{tpu_custom_call.1} parent=1 // pred_fallthru
      _
    // Predicated region
    $region38: #{tpu_custom_call.1} parent=1 // pred_check
      _
    $region39: #{tpu_custom_call.1} parent=1 // pred_check_branch
      %166 = sbr.rel (0) target = $region41
    $region40: #{tpu_custom_call.1} parent=1 // pred_region
      %167 = dma.done [#allocation6], 128
    $region41: #{tpu_custom_call.1} parent=1 // pred_fallthru
      _
    %168 = vsyncpa [#allocation6], 1
  %169 = vsyncmov [#allocation2]
  %s170 = vpop.sfrf %169
  %p171 = scmp.eq.s32.totalorder %s170, 0
  %p172 = pneg %p171
  %174 = shalt.err (%p172)

</llo_original>
